<compile_context>
chip_gen: v7x
topology: tpu7x:2x2x1
jax: 0.10.0
libtpu: 0.0.40
codegen_flags: <defaults>
</compile_context>

<pallas_src>
import jax
import jax.numpy as jnp
import numpy as np
from jax.experimental import pallas as pl
from jax.experimental.pallas import tpu as pltpu

LANE = 128  # channel axes are zero-padded to the TPU lane width


def _full_spec(shape):
    rank = len(shape)
    return pl.BlockSpec(shape, lambda i, _r=rank: (0,) * _r)


def cnn_kernel(pe_ref, po_ref, w1_ref, w2_ref, wf1_ref, wf2_ref, wf3_ref,
               bias_ref, out_ref, s2_ref):
    # Static shape bookkeeping (all known at trace time).
    BL1 = pe_ref.shape[0]            # B * L1 (pooled conv1 positions, all samples)
    CP = w1_ref.shape[1]             # 128 (padded channel width)
    K = w2_ref.shape[0] // CP        # conv kernel size (5)
    H1 = wf1_ref.shape[1]            # 128
    L2 = wf1_ref.shape[0] // CP      # pooled conv2 length per sample (3)
    H2 = wf2_ref.shape[1]            # 64
    B = out_ref.shape[0]             # batch (2)
    L1 = BL1 // B                    # 10
    SLAB = BL1 - K + 1               # conv2 rows incl. cross-batch bleed (16)

    bias = bias_ref[...]
    b1 = bias[0:1, :]                # (1, CP) conv1 bias (zero padded)
    b2 = bias[1:2, :]                # (1, CP) conv2 bias (zero padded)
    bf1 = bias[2:3, :H1]             # (1, H1)
    bf2 = bias[3:4, :H2]             # (1, H2)
    bf3 = bias[4:5, :]               # (1, CP) fc3 bias (zero padded, lane-dense)

    # ---- conv1 + bias + ReLU with MaxPool1d(2,2) fused as an even/odd max ----
    # pe/po are im2col patches of the even/odd conv1 output positions, batch
    # folded into M, so the pool is just an elementwise max of two matmuls.
    ze = jnp.dot(pe_ref[...], w1_ref[...], preferred_element_type=jnp.float32)
    zo = jnp.dot(po_ref[...], w1_ref[...], preferred_element_type=jnp.float32)
    p1 = jnp.maximum(jnp.maximum(ze, zo) + b1, 0.0)            # (B*L1, CP)

    # ---- conv2 + bias + ReLU as ONE matmul via in-register im2col ----
    # Taps concatenated at 128-aligned lane offsets; rows straddling the batch
    # boundary ("bleed") are computed but never read back.
    patches2 = jnp.concatenate([p1[k:k + SLAB, :] for k in range(K)], axis=1)
    h2 = jnp.maximum(
        jnp.dot(patches2, w2_ref[...], preferred_element_type=jnp.float32) + b2,
        0.0)                                                   # (SLAB, CP)
    s2_ref[...] = h2                                           # aligned (16,128) store

    # ---- MaxPool1d(2,2) + channel-major flatten, fused ----
    # Block j gathers pooled position j of every sample (stride L1 between
    # samples); the flatten is a lane-aligned concat feeding one fc1 matmul.
    blocks = []
    for j in range(L2):
        ev = s2_ref[pl.ds(2 * j, B, stride=L1), :]
        od = s2_ref[pl.ds(2 * j + 1, B, stride=L1), :]
        blocks.append(jnp.maximum(ev, od))
    flat = jnp.concatenate(blocks, axis=1)                     # (B, L2*CP)

    # ---- fc1 -> ReLU -> fc2 -> ReLU -> fc3, whole batch per matmul ----
    z1 = jnp.maximum(
        jnp.dot(flat, wf1_ref[...], preferred_element_type=jnp.float32) + bf1, 0.0)
    z2 = jnp.maximum(
        jnp.dot(z1, wf2_ref[...], preferred_element_type=jnp.float32) + bf2, 0.0)
    # fc3 weight/bias are zero-padded to 128 lanes -> unmasked, lane-dense store.
    out_ref[...] = (
        jnp.dot(z2, wf3_ref[...], preferred_element_type=jnp.float32) + bf3)


def cnn_forward(x, params):
    """x: (B, in_len, input_size) float32 (the PyTorch input BEFORE swapaxes)."""
    W1, b1, W2, b2, Wf1, bf1, Wf2, bf2, Wf3, bf3 = params
    B, LIN, CIN = x.shape
    C1, _, K = W1.shape
    C2 = W2.shape[0]
    H1, H2 = Wf1.shape[0], Wf2.shape[0]
    L0 = LIN - K + 1          # conv1 output length
    L1 = L0 // 2              # after pool1
    L2c = L1 - K + 1          # conv2 output length
    L2 = L2c // 2             # after pool2
    CP = LANE

    # conv1 im2col with the stride-2 pool folded in: even/odd output positions,
    # batch folded into the row (M) dimension.
    pe = jnp.concatenate([x[:, k:k + 2 * L1:2, :] for k in range(K)], axis=-1)
    po = jnp.concatenate([x[:, k + 1:k + 1 + 2 * L1:2, :] for k in range(K)],
                         axis=-1)
    pe = pe.reshape(B * L1, K * CIN)
    po = po.reshape(B * L1, K * CIN)

    # conv1 weight -> (K*CIN, CP): output channels zero-padded to the lane width.
    w1p = jnp.zeros((K * CIN, CP), jnp.float32).at[:, :C1].set(
        jnp.transpose(W1, (2, 1, 0)).reshape(K * CIN, C1))
    # conv2 weight -> (K*CP, CP): tap-major rows at 128-aligned offsets.
    w2p = jnp.zeros((K, CP, CP), jnp.float32).at[:, :C1, :C2].set(
        jnp.transpose(W2, (2, 1, 0))).reshape(K * CP, CP)
    # fc1 weight: PyTorch flatten index (c*L2 + l) remapped to the kernel's
    # (l*CP + c) layout, channels zero-padded.
    wf1p = jnp.zeros((L2, CP, H1), jnp.float32).at[:, :C2, :].set(
        jnp.transpose(Wf1.reshape(H1, C2, L2), (2, 1, 0))).reshape(L2 * CP, H1)
    wf2t = Wf2.T                                               # (H1, H2)
    # fc3 weight zero-padded to 128 output lanes so the kernel's store is
    # lane-dense; the real logit lives in column 0.
    wf3p = jnp.zeros((H2, CP), jnp.float32).at[:, :1].set(Wf3.T)

    # All five bias vectors packed into one (5, 128) table (single tiny DMA).
    bias = jnp.zeros((5, CP), jnp.float32)
    bias = bias.at[0, :C1].set(b1).at[1, :C2].set(b2)
    bias = bias.at[2, :H1].set(bf1).at[3, :H2].set(bf2).at[4, :1].set(bf3)

    inputs = (pe, po, w1p, w2p, wf1p, wf2t, wf3p, bias)

    # TODO(synk): on v6e/v7x the activations/weights could be cast to bfloat16
    # here for single-pass MXU ops; kept f32 for exact parity with the reference.
    out_padded = pl.pallas_call(
        cnn_kernel,
        out_shape=jax.ShapeDtypeStruct((B, CP), jnp.float32),
        grid=(1,),
        in_specs=[_full_spec(a.shape) for a in inputs],
        out_specs=_full_spec((B, CP)),
        scratch_shapes=[pltpu.VMEM((B * L1 - K + 1, CP), jnp.float32)],
        compiler_params=pltpu.CompilerParams(
            dimension_semantics=("arbitrary",)),
    )(*inputs)
    return out_padded[:, :1]


def reference(x, params):
    """Pure-JAX (XLA) reference mirroring the PyTorch forward exactly."""
    W1, b1, W2, b2, Wf1, bf1, Wf2, bf2, Wf3, bf3 = params
    h = jnp.swapaxes(x, 1, 2)                                  # (B, Cin, L)
    h = jax.lax.conv_general_dilated(
        h, W1, (1,), 'VALID', dimension_numbers=('NCH', 'OIH', 'NCH'))
    h = jax.nn.relu(h + b1[None, :, None])
    h = h.reshape(h.shape[0], h.shape[1], -1, 2).max(-1)       # MaxPool1d(2,2)
    h = jax.lax.conv_general_dilated(
        h, W2, (1,), 'VALID', dimension_numbers=('NCH', 'OIH', 'NCH'))
    h = jax.nn.relu(h + b2[None, :, None])
    h = h.reshape(h.shape[0], h.shape[1], -1, 2).max(-1)
    f = h.reshape(h.shape[0], -1)                              # channel-major
    z = jax.nn.relu(f @ Wf1.T + bf1)
    z = jax.nn.relu(z @ Wf2.T + bf2)
    return z @ Wf3.T + bf3


def init_params(key, in_len, input_size, conv_channels=25):
    c1 = conv_channels
    c2 = 2 * conv_channels
    flat = 2 * conv_channels * ((in_len - 4) // 2 - 4) // 2
    keys = jax.random.split(key, 10)

    def unif(k, shape, fan_in):
        bound = 1.0 / np.sqrt(fan_in)
        return jax.random.uniform(k, shape, jnp.float32, -bound, bound)

    W1 = unif(keys[0], (c1, input_size, 5), input_size * 5)
    b1 = unif(keys[1], (c1,), input_size * 5)
    W2 = unif(keys[2], (c2, c1, 5), c1 * 5)
    b2 = unif(keys[3], (c2,), c1 * 5)
    Wf1 = unif(keys[4], (128, flat), flat)
    bf1 = unif(keys[5], (128,), flat)
    Wf2 = unif(keys[6], (64, 128), 128)
    bf2 = unif(keys[7], (64,), 128)
    Wf3 = unif(keys[8], (1, 64), 64)
    bf3 = unif(keys[9], (1,), 64)
    return (W1, b1, W2, b2, Wf1, bf1, Wf2, bf2, Wf3, bf3)


if __name__ == "__main__":
    # in_len=24 -> conv1: 20 -> pool: 10 -> conv2: 6 -> pool: 3
    # flatten = 50*3 = 150 = fc1 in_features
    B, IN_LEN, INPUT_SIZE, CONV_CH = 2, 24, 8, 25
    key = jax.random.PRNGKey(0)
    kx, kp = jax.random.split(key)
    x = jax.random.normal(kx, (B, IN_LEN, INPUT_SIZE), jnp.float32)
    params = init_params(kp, IN_LEN, INPUT_SIZE, CONV_CH)

    out = jax.block_until_ready(cnn_forward(x, params))
    ref = jax.block_until_ready(reference(x, params))

    assert out.shape == (B, 1)
    np.testing.assert_allclose(np.asarray(out), np.asarray(ref),
                               rtol=5e-2, atol=5e-2)
    print("KERNEL_OK")
</pallas_src>

<mosaic_0001>
module attributes {stable_mosaic.version = 11 : i64} {
  func.func @cnn_kernel(%arg0: i32, %arg1: memref<20x40xf32, #tpu.memory_space<vmem>>, %arg2: memref<20x40xf32, #tpu.memory_space<vmem>>, %arg3: memref<40x128xf32, #tpu.memory_space<vmem>>, %arg4: memref<640x128xf32, #tpu.memory_space<vmem>>, %arg5: memref<384x128xf32, #tpu.memory_space<vmem>>, %arg6: memref<128x64xf32, #tpu.memory_space<vmem>>, %arg7: memref<64x128xf32, #tpu.memory_space<vmem>>, %arg8: memref<5x128xf32, #tpu.memory_space<vmem>>, %arg9: memref<2x128xf32, #tpu.memory_space<vmem>>, %arg10: memref<16x128xf32, #tpu.memory_space<vmem>>) attributes {dimension_semantics = [#tpu.dimension_semantics<arbitrary>], iteration_bounds = array<i64: 1>, scalar_prefetch = 0 : i64, scratch_operands = 1 : i64, tpu.core_type = #tpu.core_type<tc>, window_params = [{pipeline_mode = #tpu.pipeline_mode<synchronous>, transform_indices = @transform_0, window_bounds = array<i64: 20, 40>}, {pipeline_mode = #tpu.pipeline_mode<synchronous>, transform_indices = @transform_1, window_bounds = array<i64: 20, 40>}, {pipeline_mode = #tpu.pipeline_mode<synchronous>, transform_indices = @transform_2, window_bounds = array<i64: 40, 128>}, {pipeline_mode = #tpu.pipeline_mode<synchronous>, transform_indices = @transform_3, window_bounds = array<i64: 640, 128>}, {pipeline_mode = #tpu.pipeline_mode<synchronous>, transform_indices = @transform_4, window_bounds = array<i64: 384, 128>}, {pipeline_mode = #tpu.pipeline_mode<synchronous>, transform_indices = @transform_5, window_bounds = array<i64: 128, 64>}, {pipeline_mode = #tpu.pipeline_mode<synchronous>, transform_indices = @transform_6, window_bounds = array<i64: 64, 128>}, {pipeline_mode = #tpu.pipeline_mode<synchronous>, transform_indices = @transform_7, window_bounds = array<i64: 5, 128>}, {pipeline_mode = #tpu.pipeline_mode<synchronous>, transform_indices = @transform_8, window_bounds = array<i64: 2, 128>}]} {
    %c0 = arith.constant 0 : index
    %c0_0 = arith.constant 0 : index
    %0 = vector.load %arg8[%c0, %c0_0] : memref<5x128xf32, #tpu.memory_space<vmem>>, vector<5x128xf32>
    %1 = vector.extract_strided_slice %0 {offsets = [0, 0], sizes = [1, 128], strides = [1, 1]} : vector<5x128xf32> to vector<1x128xf32>
    %2 = vector.extract_strided_slice %0 {offsets = [1, 0], sizes = [1, 128], strides = [1, 1]} : vector<5x128xf32> to vector<1x128xf32>
    %3 = vector.extract_strided_slice %0 {offsets = [2, 0], sizes = [1, 128], strides = [1, 1]} : vector<5x128xf32> to vector<1x128xf32>
    %4 = vector.extract_strided_slice %0 {offsets = [3, 0], sizes = [1, 64], strides = [1, 1]} : vector<5x128xf32> to vector<1x64xf32>
    %5 = vector.extract_strided_slice %0 {offsets = [4, 0], sizes = [1, 128], strides = [1, 1]} : vector<5x128xf32> to vector<1x128xf32>
    %c0_1 = arith.constant 0 : index
    %c0_2 = arith.constant 0 : index
    %6 = vector.load %arg1[%c0_1, %c0_2] : memref<20x40xf32, #tpu.memory_space<vmem>>, vector<20x40xf32>
    %c0_3 = arith.constant 0 : index
    %c0_4 = arith.constant 0 : index
    %7 = vector.load %arg3[%c0_3, %c0_4] : memref<40x128xf32, #tpu.memory_space<vmem>>, vector<40x128xf32>
    %cst = arith.constant dense<0.000000e+00> : vector<20x128xf32>
    %8 = tpu.matmul %6, %7, %cst {dimension_numbers = #tpu.dot_dimension_numbers<[1], [0], [0], [1], [0, 0, 1, 1], [], []>} : vector<20x40xf32>, vector<40x128xf32>, vector<20x128xf32> -> vector<20x128xf32>
    %c0_5 = arith.constant 0 : index
    %c0_6 = arith.constant 0 : index
    %9 = vector.load %arg2[%c0_5, %c0_6] : memref<20x40xf32, #tpu.memory_space<vmem>>, vector<20x40xf32>
    %c0_7 = arith.constant 0 : index
    %c0_8 = arith.constant 0 : index
    %10 = vector.load %arg3[%c0_7, %c0_8] : memref<40x128xf32, #tpu.memory_space<vmem>>, vector<40x128xf32>
    %cst_9 = arith.constant dense<0.000000e+00> : vector<20x128xf32>
    %11 = tpu.matmul %9, %10, %cst_9 {dimension_numbers = #tpu.dot_dimension_numbers<[1], [0], [0], [1], [0, 0, 1, 1], [], []>} : vector<20x40xf32>, vector<40x128xf32>, vector<20x128xf32> -> vector<20x128xf32>
    %12 = arith.maximumf %8, %11 : vector<20x128xf32>
    %13 = vector.broadcast %1 : vector<1x128xf32> to vector<20x128xf32>
    %14 = arith.addf %12, %13 : vector<20x128xf32>
    %cst_10 = arith.constant 0.000000e+00 : f32
    %15 = vector.broadcast %cst_10 : f32 to vector<20x128xf32>
    %16 = arith.maximumf %14, %15 : vector<20x128xf32>
    %17 = vector.extract_strided_slice %16 {offsets = [0, 0], sizes = [16, 128], strides = [1, 1]} : vector<20x128xf32> to vector<16x128xf32>
    %18 = vector.extract_strided_slice %16 {offsets = [1, 0], sizes = [16, 128], strides = [1, 1]} : vector<20x128xf32> to vector<16x128xf32>
    %19 = vector.extract_strided_slice %16 {offsets = [2, 0], sizes = [16, 128], strides = [1, 1]} : vector<20x128xf32> to vector<16x128xf32>
    %20 = vector.extract_strided_slice %16 {offsets = [3, 0], sizes = [16, 128], strides = [1, 1]} : vector<20x128xf32> to vector<16x128xf32>
    %21 = vector.extract_strided_slice %16 {offsets = [4, 0], sizes = [16, 128], strides = [1, 1]} : vector<20x128xf32> to vector<16x128xf32>
    %22 = tpu.concatenate %17, %18, %19, %20, %21 in 1 : vector<16x128xf32>, vector<16x128xf32>, vector<16x128xf32>, vector<16x128xf32>, vector<16x128xf32> -> vector<16x640xf32>
    %c0_11 = arith.constant 0 : index
    %c0_12 = arith.constant 0 : index
    %23 = vector.load %arg4[%c0_11, %c0_12] : memref<640x128xf32, #tpu.memory_space<vmem>>, vector<640x128xf32>
    %cst_13 = arith.constant dense<0.000000e+00> : vector<16x128xf32>
    %24 = tpu.matmul %22, %23, %cst_13 {dimension_numbers = #tpu.dot_dimension_numbers<[1], [0], [0], [1], [0, 0, 1, 1], [], []>} : vector<16x640xf32>, vector<640x128xf32>, vector<16x128xf32> -> vector<16x128xf32>
    %25 = vector.broadcast %2 : vector<1x128xf32> to vector<16x128xf32>
    %26 = arith.addf %24, %25 : vector<16x128xf32>
    %cst_14 = arith.constant 0.000000e+00 : f32
    %27 = vector.broadcast %cst_14 : f32 to vector<16x128xf32>
    %28 = arith.maximumf %26, %27 : vector<16x128xf32>
    %c0_15 = arith.constant 0 : index
    %c0_16 = arith.constant 0 : index
    %29 = vector.load %arg10[%c0_15, %c0_16] : memref<16x128xf32, #tpu.memory_space<vmem>>, vector<16x128xf32>
    tpu.vector_store %arg10[%c0_15, %c0_16], %28 {strides = array<i32>} : memref<16x128xf32, #tpu.memory_space<vmem>>, vector<16x128xf32>,
    %c0_17 = arith.constant 0 : index
    %c0_18 = arith.constant 0 : index
    %30 = tpu.strided_load %arg10[%c0_17, %c0_18] {strides = array<i32: 10, 1>} : memref<16x128xf32, #tpu.memory_space<vmem>>, vector<2x128xf32>
    %c1 = arith.constant 1 : index
    %c0_19 = arith.constant 0 : index
    %31 = tpu.strided_load %arg10[%c1, %c0_19] {strides = array<i32: 10, 1>} : memref<16x128xf32, #tpu.memory_space<vmem>>, vector<2x128xf32>
    %32 = arith.maximumf %30, %31 : vector<2x128xf32>
    %c2 = arith.constant 2 : index
    %c0_20 = arith.constant 0 : index
    %33 = tpu.strided_load %arg10[%c2, %c0_20] {strides = array<i32: 10, 1>} : memref<16x128xf32, #tpu.memory_space<vmem>>, vector<2x128xf32>
    %c3 = arith.constant 3 : index
    %c0_21 = arith.constant 0 : index
    %34 = tpu.strided_load %arg10[%c3, %c0_21] {strides = array<i32: 10, 1>} : memref<16x128xf32, #tpu.memory_space<vmem>>, vector<2x128xf32>
    %35 = arith.maximumf %33, %34 : vector<2x128xf32>
    %c4 = arith.constant 4 : index
    %c0_22 = arith.constant 0 : index
    %36 = tpu.strided_load %arg10[%c4, %c0_22] {strides = array<i32: 10, 1>} : memref<16x128xf32, #tpu.memory_space<vmem>>, vector<2x128xf32>
    %c5 = arith.constant 5 : index
    %c0_23 = arith.constant 0 : index
    %37 = tpu.strided_load %arg10[%c5, %c0_23] {strides = array<i32: 10, 1>} : memref<16x128xf32, #tpu.memory_space<vmem>>, vector<2x128xf32>
    %38 = arith.maximumf %36, %37 : vector<2x128xf32>
    %39 = tpu.concatenate %32, %35, %38 in 1 : vector<2x128xf32>, vector<2x128xf32>, vector<2x128xf32> -> vector<2x384xf32>
    %c0_24 = arith.constant 0 : index
    %c0_25 = arith.constant 0 : index
    %40 = vector.load %arg5[%c0_24, %c0_25] : memref<384x128xf32, #tpu.memory_space<vmem>>, vector<384x128xf32>
    %cst_26 = arith.constant dense<0.000000e+00> : vector<2x128xf32>
    %41 = tpu.matmul %39, %40, %cst_26 {dimension_numbers = #tpu.dot_dimension_numbers<[1], [0], [0], [1], [0, 0, 1, 1], [], []>} : vector<2x384xf32>, vector<384x128xf32>, vector<2x128xf32> -> vector<2x128xf32>
    %42 = vector.broadcast %3 : vector<1x128xf32> to vector<2x128xf32>
    %43 = arith.addf %41, %42 : vector<2x128xf32>
    %cst_27 = arith.constant 0.000000e+00 : f32
    %44 = vector.broadcast %cst_27 : f32 to vector<2x128xf32>
    %45 = arith.maximumf %43, %44 : vector<2x128xf32>
    %c0_28 = arith.constant 0 : index
    %c0_29 = arith.constant 0 : index
    %46 = vector.load %arg6[%c0_28, %c0_29] : memref<128x64xf32, #tpu.memory_space<vmem>>, vector<128x64xf32>
    %cst_30 = arith.constant dense<0.000000e+00> : vector<2x64xf32>
    %47 = tpu.matmul %45, %46, %cst_30 {dimension_numbers = #tpu.dot_dimension_numbers<[1], [0], [0], [1], [0, 0, 1, 1], [], []>} : vector<2x128xf32>, vector<128x64xf32>, vector<2x64xf32> -> vector<2x64xf32>
    %48 = vector.broadcast %4 : vector<1x64xf32> to vector<2x64xf32>
    %49 = arith.addf %47, %48 : vector<2x64xf32>
    %cst_31 = arith.constant 0.000000e+00 : f32
    %50 = vector.broadcast %cst_31 : f32 to vector<2x64xf32>
    %51 = arith.maximumf %49, %50 : vector<2x64xf32>
    %c0_32 = arith.constant 0 : index
    %c0_33 = arith.constant 0 : index
    %52 = vector.load %arg7[%c0_32, %c0_33] : memref<64x128xf32, #tpu.memory_space<vmem>>, vector<64x128xf32>
    %cst_34 = arith.constant dense<0.000000e+00> : vector<2x128xf32>
    %53 = tpu.matmul %51, %52, %cst_34 {dimension_numbers = #tpu.dot_dimension_numbers<[1], [0], [0], [1], [0, 0, 1, 1], [], []>} : vector<2x64xf32>, vector<64x128xf32>, vector<2x128xf32> -> vector<2x128xf32>
    %54 = vector.broadcast %5 : vector<1x128xf32> to vector<2x128xf32>
    %55 = arith.addf %53, %54 : vector<2x128xf32>
    %c0_35 = arith.constant 0 : index
    %c0_36 = arith.constant 0 : index
    %56 = vector.load %arg9[%c0_35, %c0_36] : memref<2x128xf32, #tpu.memory_space<vmem>>, vector<2x128xf32>
    tpu.vector_store %arg9[%c0_35, %c0_36], %55 {strides = array<i32>} : memref<2x128xf32, #tpu.memory_space<vmem>>, vector<2x128xf32>,
    return
  }
  func.func @transform_0(%arg0: i32) -> (i32, i32) {
    %c0_i32 = arith.constant 0 : i32
    %c0_i32_0 = arith.constant 0 : i32
    %c0_i32_1 = arith.constant 0 : i32
    return %c0_i32, %c0_i32_0 : i32, i32
  }
  func.func @transform_1(%arg0: i32) -> (i32, i32) {
    %c0_i32 = arith.constant 0 : i32
    %c0_i32_0 = arith.constant 0 : i32
    %c0_i32_1 = arith.constant 0 : i32
    return %c0_i32, %c0_i32_0 : i32, i32
  }
  func.func @transform_2(%arg0: i32) -> (i32, i32) {
    %c0_i32 = arith.constant 0 : i32
    %c0_i32_0 = arith.constant 0 : i32
    %c0_i32_1 = arith.constant 0 : i32
    return %c0_i32, %c0_i32_0 : i32, i32
  }
  func.func @transform_3(%arg0: i32) -> (i32, i32) {
    %c0_i32 = arith.constant 0 : i32
    %c0_i32_0 = arith.constant 0 : i32
    %c0_i32_1 = arith.constant 0 : i32
    return %c0_i32, %c0_i32_0 : i32, i32
  }
  func.func @transform_4(%arg0: i32) -> (i32, i32) {
    %c0_i32 = arith.constant 0 : i32
    %c0_i32_0 = arith.constant 0 : i32
    %c0_i32_1 = arith.constant 0 : i32
    return %c0_i32, %c0_i32_0 : i32, i32
  }
  func.func @transform_5(%arg0: i32) -> (i32, i32) {
    %c0_i32 = arith.constant 0 : i32
    %c0_i32_0 = arith.constant 0 : i32
    %c0_i32_1 = arith.constant 0 : i32
    return %c0_i32, %c0_i32_0 : i32, i32
  }
  func.func @transform_6(%arg0: i32) -> (i32, i32) {
    %c0_i32 = arith.constant 0 : i32
    %c0_i32_0 = arith.constant 0 : i32
    %c0_i32_1 = arith.constant 0 : i32
    return %c0_i32, %c0_i32_0 : i32, i32
  }
  func.func @transform_7(%arg0: i32) -> (i32, i32) {
    %c0_i32 = arith.constant 0 : i32
    %c0_i32_0 = arith.constant 0 : i32
    %c0_i32_1 = arith.constant 0 : i32
    return %c0_i32, %c0_i32_0 : i32, i32
  }
  func.func @transform_8(%arg0: i32) -> (i32, i32) {
    %c0_i32 = arith.constant 0 : i32
    %c0_i32_0 = arith.constant 0 : i32
    %c0_i32_1 = arith.constant 0 : i32
    return %c0_i32, %c0_i32_0 : i32, i32
  }
}

</mosaic_0001>

<llo_original>
// kernel: tpu_custom_call.1
$region0: #{tpu_custom_call.1}
  #allocation0 [shape = 'u32[]', space=smem, size = 0x4, offset = 0x4, fixed_abs, tag = 'smem constant byte address 0x4 - core index']
  #allocation1 [shape = 'u32[144,128]{1,0:T(1,128)}', space=vmem, size = 0x12000, scoped, tag = 'internal scratch']
  #allocation2 [shape = 'f32[16,128]{1,0:T(8,128)}', space=vmem, size = 0x2000, scoped, tag = 'scratch operand']
  %s0 = inlined_call_operand.vmem [shape: f32[20,40], index: 0, kind: input, shape index: {}]
  %s1 = inlined_call_operand.vmem [shape: f32[20,40], index: 1, kind: input, shape index: {}]
  %s2 = inlined_call_operand.vmem [shape: f32[40,128], index: 2, kind: input, shape index: {}]
  %s3 = inlined_call_operand.hbm [shape: f32[640,128], index: 3, kind: input, shape index: {}]
  %s4 = inlined_call_operand.hbm [shape: f32[384,128], index: 4, kind: input, shape index: {}]
  %s5 = inlined_call_operand.vmem [shape: f32[128,64], index: 5, kind: input, shape index: {}]
  %s6 = inlined_call_operand.vmem [shape: f32[64,128], index: 6, kind: input, shape index: {}]
  %s7 = inlined_call_operand.vmem [shape: f32[5,128], index: 7, kind: input, shape index: {}]
  %s8 = inlined_call_operand.hbm [shape: f32[2,128], index: 8, kind: output, shape index: {}]
  %s9 = sld [smem:[#allocation0]]
  $region50: #{tpu_custom_call.1} parent=0
    _
  %s11 = ssub.s32 1, %s9
  %s12 = scalar_select 0, %s11, %s9
  $region1: #{tpu_custom_call.1} parent=0
    #allocation3 [shape = 'u8[327680]{0}', space=vmem, size = 0x50000, scoped, tag = 'input window, operand 3, single buffered']
    #allocation4 [shape = 's32[1]{0}', space=sflag, size = 0x4, scoped, tag = 'scoped memory for tpu_custom_call.1']
    #allocation5 [shape = 's32[1]{0}', space=sflag, size = 0x4, scoped, tag = 'scoped memory for tpu_custom_call.1']
    #allocation6 [shape = 'u8[196608]{0}', space=vmem, size = 0x30000, scoped, tag = 'input window, operand 4, single buffered']
    #allocation7 [shape = 's32[1]{0}', space=sflag, size = 0x4, scoped, tag = 'scoped memory for tpu_custom_call.1']
    #allocation8 [shape = 'u8[1024]{0}', space=vmem, size = 0x400, scoped, tag = 'output window, operand 0, single buffered']
    %13 = vsyncpa [#allocation4], 0
    %14 = vsyncpa [#allocation7], 0
    %15 = vsyncpa [#allocation5], 0
    // Predicated region
    $region2: #{tpu_custom_call.1} parent=1 // pred_check
      _
    $region3: #{tpu_custom_call.1} parent=1 // pred_check_branch
      %17 = sbr.rel (0) target = $region5
    $region4: #{tpu_custom_call.1} parent=1 // pred_region
      _
    $region5: #{tpu_custom_call.1} parent=1 // pred_fallthru
      _
    // Predicated region
    $region6: #{tpu_custom_call.1} parent=1 // pred_check
      _
    $region7: #{tpu_custom_call.1} parent=1 // pred_check_branch
      %19 = sbr.rel (0) target = $region9
    $region8: #{tpu_custom_call.1} parent=1 // pred_region
      _
    $region9: #{tpu_custom_call.1} parent=1 // pred_fallthru
      _
    // Predicated region
    $region10: #{tpu_custom_call.1} parent=1 // pred_check
      _
    $region11: #{tpu_custom_call.1} parent=1 // pred_check_branch
      %21 = sbr.rel (0) target = $region13
    $region12: #{tpu_custom_call.1} parent=1 // pred_region
      _
    $region13: #{tpu_custom_call.1} parent=1 // pred_fallthru
      _
    // Predicated region
    $region14: #{tpu_custom_call.1} parent=1 // pred_check
      _
    $region15: #{tpu_custom_call.1} parent=1 // pred_check_branch
      %23 = sbr.rel (0) target = $region17
    $region16: #{tpu_custom_call.1} parent=1 // pred_region
      %s25 = ssub.s32 10240, 10240
      %26 = vsyncadd [#allocation4], %s25
      %s27 = sshll.u32 [#allocation3], 4
      %s28 = int_to_ptr.vmem [resolvable:$true] %s27
      %33 = dma.hbm_to_vmem [thread:$0]  %s3, 10240, %s28, [#allocation4], 128, 128, 8
    $region17: #{tpu_custom_call.1} parent=1 // pred_fallthru
      _
    // Predicated region
    $region18: #{tpu_custom_call.1} parent=1 // pred_check
      _
    $region19: #{tpu_custom_call.1} parent=1 // pred_check_branch
      %35 = sbr.rel (0) target = $region21
    $region20: #{tpu_custom_call.1} parent=1 // pred_region
      %s37 = ssub.s32 6144, 6144
      %38 = vsyncadd [#allocation7], %s37
      %s39 = sshll.u32 [#allocation6], 4
      %s40 = int_to_ptr.vmem [resolvable:$true] %s39
      %45 = dma.hbm_to_vmem [thread:$0]  %s4, 6144, %s40, [#allocation7], 128, 128, 8
    $region21: #{tpu_custom_call.1} parent=1 // pred_fallthru
      _
    // Predicated region
    $region22: #{tpu_custom_call.1} parent=1 // pred_check
      _
    $region23: #{tpu_custom_call.1} parent=1 // pred_check_branch
      %47 = sbr.rel (0) target = $region25
    $region24: #{tpu_custom_call.1} parent=1 // pred_region
      _
    $region25: #{tpu_custom_call.1} parent=1 // pred_fallthru
      _
    // Predicated region
    $region26: #{tpu_custom_call.1} parent=1 // pred_check
      _
    $region27: #{tpu_custom_call.1} parent=1 // pred_check_branch
      %49 = sbr.rel (0) target = $region29
    $region28: #{tpu_custom_call.1} parent=1 // pred_region
      _
    $region29: #{tpu_custom_call.1} parent=1 // pred_fallthru
      _
    // Predicated region
    $region30: #{tpu_custom_call.1} parent=1 // pred_check
      _
    $region31: #{tpu_custom_call.1} parent=1 // pred_check_branch
      %51 = sbr.rel (0) target = $region33
    $region32: #{tpu_custom_call.1} parent=1 // pred_region
      _
    $region33: #{tpu_custom_call.1} parent=1 // pred_fallthru
      _
    // Predicated region
    $region34: #{tpu_custom_call.1} parent=1 // pred_check
      _
    $region35: #{tpu_custom_call.1} parent=1 // pred_check_branch
      %53 = sbr.rel (0) target = $region37
    $region36: #{tpu_custom_call.1} parent=1 // pred_region
      %54 = dma.done [#allocation4], 10240
    $region37: #{tpu_custom_call.1} parent=1 // pred_fallthru
      _
    // Predicated region
    $region38: #{tpu_custom_call.1} parent=1 // pred_check
      _
    $region39: #{tpu_custom_call.1} parent=1 // pred_check_branch
      %56 = sbr.rel (0) target = $region41
    $region40: #{tpu_custom_call.1} parent=1 // pred_region
      %57 = dma.done [#allocation7], 6144
    $region41: #{tpu_custom_call.1} parent=1 // pred_fallthru
      _
    %v58 = vld [vmem:[%s7] sm:$0x1f]
    %v59 = vld [vmem:[%s0] sm:$0xff]
    %v60 = vld [vmem:[%s0 + $0x8] sm:$0xff]
    %v61 = vld [vmem:[%s0 + $0x10] sm:$0xf]
    %v62 = vld [vmem:[%s2] sm:$0xff]
    %v63 = vld [vmem:[%s2 + $0x8] sm:$0xff]
    %v64 = vld [vmem:[%s2 + $0x10] sm:$0xff]
    %v65 = vld [vmem:[%s2 + $0x18] sm:$0xff]
    %v66 = vld [vmem:[%s2 + $0x20] sm:$0xff]
    %vm67 = vcmask 326656
    %v69 = vsel %vm67, %v59, 0
    %v72 = vsel %vm67, %v60, 0
    %v75 = vsel %vm67, %v61, 0
    %77 = vmatprep.subr.mxu0 0.0
    %78 = vmatpush1.msra.mxu0 %v62
    %79 = vmatprep.subr.mxu0 0.0
    %80 = vmatpush1.msra.mxu0 %v63
    %81 = vmatprep.subr.mxu0 0.0
    %82 = vmatpush1.msra.mxu0 %v64
    %83 = vmatprep.subr.mxu0 0.0
    %84 = vmatpush1.msra.mxu0 %v65
    %85 = vmatprep.subr.mxu0 0.0
    %86 = vmatpush1.msra.mxu0 %v66
    %87 = vmatprep.subr.mxu0 0.0
    %88 = vmatpush1.msra.mxu0 0.0
    %89 = vmatprep.subr.mxu0 0.0
    %90 = vmatpush1.msra.mxu0 0.0
    %91 = vmatprep.subr.mxu0 0.0
    %92 = vmatpush1.msra.mxu0 0.0
    %93 = vmatprep.subr.mxu0 0.0
    %94 = vmatpush1.msra.mxu0 0.0
    %95 = vmatprep.subr.mxu0 0.0
    %96 = vmatpush1.msra.mxu0 0.0
    %97 = vmatprep.subr.mxu0 0.0
    %98 = vmatpush1.msra.mxu0 0.0
    %99 = vmatprep.subr.mxu0 0.0
    %100 = vmatpush1.msra.mxu0 0.0
    %101 = vmatprep.subr.mxu0 0.0
    %102 = vmatpush1.msra.mxu0 0.0
    %103 = vmatprep.subr.mxu0 0.0
    %104 = vmatpush1.msra.mxu0 0.0
    %105 = vmatprep.subr.mxu0 0.0
    %106 = vmatpush1.msra.mxu0 0.0
    %107 = vmatprep.subr.mxu0 0.0
    %108 = vmatpush1.msra.mxu0 0.0
    %109 = vmatprep.subr.mxu0 0.0
    %110 = vmatpush1.msra.mxu0 0.0
    %111 = vmatprep.subr.mxu0 0.0
    %112 = vmatpush1.msra.mxu0 0.0
    %113 = vmatprep.subr.mxu0 0.0
    %114 = vmatpush1.msra.mxu0 0.0
    %115 = vmatprep.subr.mxu0 0.0
    %116 = vmatpush1.msra.mxu0 0.0
    %117 = vmatprep.subr.mxu0 0.0
    %118 = vmatpush1.msra.mxu0 0.0
    %119 = vmatprep.subr.mxu0 0.0
    %120 = vmatpush1.msra.mxu0 0.0
    %121 = vmatprep.subr.mxu0 0.0
    %122 = vmatpush1.msra.mxu0 0.0
    %123 = vmatprep.subr.mxu0 0.0
    %124 = vmatpush1.msra.mxu0 0.0
    %125 = vmatprep.subr.mxu0 0.0
    %126 = vmatpush1.msra.mxu0 0.0
    %127 = vmatprep.subr.mxu0 0.0
    %128 = vmatpush1.msra.mxu0 0.0
    %129 = vmatprep.subr.mxu0 0.0
    %130 = vmatpush1.msra.mxu0 0.0
    %131 = vmatprep.subr.mxu0 0.0
    %132 = vmatpush1.msra.mxu0 0.0
    %133 = vmatprep.subr.mxu0 0.0
    %134 = vmatpush1.msra.mxu0 0.0
    %135 = vmatprep.subr.mxu0 0.0
    %136 = vmatpush1.msra.mxu0 0.0
    %137 = vmatprep.subr.mxu0 0.0
    %138 = vmatpush1.msra.mxu0 0.0
    %139 = vmatprep.subr.mxu0 0.0
    %140 = vmatpush1.msra.mxu0 0.0
    %141 = vmatprep.mubr.f32.mxu0 0.0
    %142 = vmatmul.mubr.f32.gmra.mrb[0].mxu0 %v69
    %v143 = vpop.f32.mrb[0].mxu0
    %v144 = vadd.f32 0.0, %v143
    %v145 = vpop.f32.mrb[0].mxu0
    %146 = vmatprep.mubr.f32.mxu0 0.0
    %147 = vmatmul.mubr.f32.gmra.mrb[0].mxu0 %v72
    %v148 = vpop.f32.mrb[0].mxu0
    %v149 = vadd.f32 0.0, %v148
    %v150 = vpop.f32.mrb[0].mxu0
    %151 = vmatprep.mubr.f32.mxu0 0.0
    %152 = vmatmul.mubr.f32.gmra.mrb[0].mxu0 %v75
    %v153 = vpop.f32.mrb[0].mxu0
    %v154 = vadd.f32 0.0, %v153
    %v155 = vpop.f32.mrb[0].mxu0
    %156 = vdwg.mxu0
    %v157 = vld [vmem:[%s1] sm:$0xff]
    %v158 = vld [vmem:[%s1 + $0x8] sm:$0xff]
    %v159 = vld [vmem:[%s1 + $0x10] sm:$0xf]
    %v161 = vsel %vm67, %v157, 0
    %v164 = vsel %vm67, %v158, 0
    %v167 = vsel %vm67, %v159, 0
    %169 = vmatprep.subr.mxu0 0.0
    %170 = vmatpush1.msra.mxu0 %v62
    %171 = vmatprep.subr.mxu0 0.0
    %172 = vmatpush1.msra.mxu0 %v63
    %173 = vmatprep.subr.mxu0 0.0
    %174 = vmatpush1.msra.mxu0 %v64
    %175 = vmatprep.subr.mxu0 0.0
    %176 = vmatpush1.msra.mxu0 %v65
    %177 = vmatprep.subr.mxu0 0.0
    %178 = vmatpush1.msra.mxu0 %v66
    %179 = vmatprep.subr.mxu0 0.0
    %180 = vmatpush1.msra.mxu0 0.0
    %181 = vmatprep.subr.mxu0 0.0
    %182 = vmatpush1.msra.mxu0 0.0
    %183 = vmatprep.subr.mxu0 0.0
    %184 = vmatpush1.msra.mxu0 0.0
    %185 = vmatprep.subr.mxu0 0.0
    %186 = vmatpush1.msra.mxu0 0.0
    %187 = vmatprep.subr.mxu0 0.0
    %188 = vmatpush1.msra.mxu0 0.0
    %189 = vmatprep.subr.mxu0 0.0
    %190 = vmatpush1.msra.mxu0 0.0
    %191 = vmatprep.subr.mxu0 0.0
    %192 = vmatpush1.msra.mxu0 0.0
    %193 = vmatprep.subr.mxu0 0.0
    %194 = vmatpush1.msra.mxu0 0.0
    %195 = vmatprep.subr.mxu0 0.0
    %196 = vmatpush1.msra.mxu0 0.0
    %197 = vmatprep.subr.mxu0 0.0
    %198 = vmatpush1.msra.mxu0 0.0
    %199 = vmatprep.subr.mxu0 0.0
    %200 = vmatpush1.msra.mxu0 0.0
    %201 = vmatprep.subr.mxu0 0.0
    %202 = vmatpush1.msra.mxu0 0.0
    %203 = vmatprep.subr.mxu0 0.0
    %204 = vmatpush1.msra.mxu0 0.0
    %205 = vmatprep.subr.mxu0 0.0
    %206 = vmatpush1.msra.mxu0 0.0
    %207 = vmatprep.subr.mxu0 0.0
    %208 = vmatpush1.msra.mxu0 0.0
    %209 = vmatprep.subr.mxu0 0.0
    %210 = vmatpush1.msra.mxu0 0.0
    %211 = vmatprep.subr.mxu0 0.0
    %212 = vmatpush1.msra.mxu0 0.0
    %213 = vmatprep.subr.mxu0 0.0
    %214 = vmatpush1.msra.mxu0 0.0
    %215 = vmatprep.subr.mxu0 0.0
    %216 = vmatpush1.msra.mxu0 0.0
    %217 = vmatprep.subr.mxu0 0.0
    %218 = vmatpush1.msra.mxu0 0.0
    %219 = vmatprep.subr.mxu0 0.0
    %220 = vmatpush1.msra.mxu0 0.0
    %221 = vmatprep.subr.mxu0 0.0
    %222 = vmatpush1.msra.mxu0 0.0
    %223 = vmatprep.subr.mxu0 0.0
    %224 = vmatpush1.msra.mxu0 0.0
    %225 = vmatprep.subr.mxu0 0.0
    %226 = vmatpush1.msra.mxu0 0.0
    %227 = vmatprep.subr.mxu0 0.0
    %228 = vmatpush1.msra.mxu0 0.0
    %229 = vmatprep.subr.mxu0 0.0
    %230 = vmatpush1.msra.mxu0 0.0
    %231 = vmatprep.subr.mxu0 0.0
    %232 = vmatpush1.msra.mxu0 0.0
    %233 = vmatprep.mubr.f32.mxu0 0.0
    %234 = vmatmul.mubr.f32.gmra.mrb[0].mxu0 %v161
    %v235 = vpop.f32.mrb[0].mxu0
    %v236 = vadd.f32 0.0, %v235
    %v237 = vpop.f32.mrb[0].mxu0
    %238 = vmatprep.mubr.f32.mxu0 0.0
    %239 = vmatmul.mubr.f32.gmra.mrb[0].mxu0 %v164
    %v240 = vpop.f32.mrb[0].mxu0
    %v241 = vadd.f32 0.0, %v240
    %v242 = vpop.f32.mrb[0].mxu0
    %243 = vmatprep.mubr.f32.mxu0 0.0
    %244 = vmatmul.mubr.f32.gmra.mrb[0].mxu0 %v167
    %v245 = vpop.f32.mrb[0].mxu0
    %v246 = vadd.f32 0.0, %v245
    %v247 = vpop.f32.mrb[0].mxu0
    %248 = vdwg.mxu0
    %v249 = vmax.f32 %v144, %v236
    %v250 = vmax.f32 %v149, %v241
    %v251 = vmax.f32 %v154, %v246
    %v252 = vlaneseq
    %v253 = vshrl.u32 %v252, 7
    %v254 = vsub.s32 0, %v253
    %v255 = vrot.slane %v58, %v254
    %v256 = vadd.f32 %v249, %v255
    %v257 = vadd.f32 %v250, %v255
    %v258 = vadd.f32 %v251, %v255
    %v259 = vmax.f32 %v256, 0.0
    %v260 = vmax.f32 %v257, 0.0
    %v261 = vmax.f32 %v258, 0.0
    %vm265 = vcmask 1046528
    %v266 = vrot.slane %v259, 1
    %v267 = vrot.slane %v260, 1
    %v268 = vsel %vm265, %v266, %v267
    %v269 = vrot.slane %v261, 1
    %v270 = vsel %vm265, %v267, %v269
    %vm273 = vcmask 1045504
    %v274 = vrot.slane %v259, 2
    %v275 = vrot.slane %v260, 2
    %v276 = vsel %vm273, %v274, %v275
    %v277 = vrot.slane %v261, 2
    %v278 = vsel %vm273, %v275, %v277
    %vm281 = vcmask 1044480
    %v282 = vrot.slane %v259, 3
    %v283 = vrot.slane %v260, 3
    %v284 = vsel %vm281, %v282, %v283
    %v285 = vrot.slane %v261, 3
    %v286 = vsel %vm281, %v283, %v285
    %vm289 = vcmask 1043456
    %v290 = vrot.slane %v259, 4
    %v291 = vrot.slane %v260, 4
    %v292 = vsel %vm289, %v290, %v291
    %v293 = vrot.slane %v261, 4
    %v294 = vsel %vm289, %v291, %v293
    %v297 = vld [vmem:[#allocation3] sm:$0xff]
    %v298 = vld [vmem:[#allocation3 + $0x8] sm:$0xff]
    %v299 = vld [vmem:[#allocation3 + $0x10] sm:$0xff]
    %v300 = vld [vmem:[#allocation3 + $0x18] sm:$0xff]
    %v301 = vld [vmem:[#allocation3 + $0x20] sm:$0xff]
    %v302 = vld [vmem:[#allocation3 + $0x28] sm:$0xff]
    %v303 = vld [vmem:[#allocation3 + $0x30] sm:$0xff]
    %v304 = vld [vmem:[#allocation3 + $0x38] sm:$0xff]
    %v305 = vld [vmem:[#allocation3 + $0x40] sm:$0xff]
    %v306 = vld [vmem:[#allocation3 + $0x48] sm:$0xff]
    %v307 = vld [vmem:[#allocation3 + $0x50] sm:$0xff]
    %v308 = vld [vmem:[#allocation3 + $0x58] sm:$0xff]
    %v309 = vld [vmem:[#allocation3 + $0x60] sm:$0xff]
    %v310 = vld [vmem:[#allocation3 + $0x68] sm:$0xff]
    %v311 = vld [vmem:[#allocation3 + $0x70] sm:$0xff]
    %v312 = vld [vmem:[#allocation3 + $0x78] sm:$0xff]
    %v313 = vld [vmem:[#allocation3 + $0x80] sm:$0xff]
    %v314 = vld [vmem:[#allocation3 + $0x88] sm:$0xff]
    %v315 = vld [vmem:[#allocation3 + $0x90] sm:$0xff]
    %v316 = vld [vmem:[#allocation3 + $0x98] sm:$0xff]
    %v317 = vld [vmem:[#allocation3 + $0xa0] sm:$0xff]
    %v318 = vld [vmem:[#allocation3 + $0xa8] sm:$0xff]
    %v319 = vld [vmem:[#allocation3 + $0xb0] sm:$0xff]
    %v320 = vld [vmem:[#allocation3 + $0xb8] sm:$0xff]
    %v321 = vld [vmem:[#allocation3 + $0xc0] sm:$0xff]
    %v322 = vld [vmem:[#allocation3 + $0xc8] sm:$0xff]
    %v323 = vld [vmem:[#allocation3 + $0xd0] sm:$0xff]
    %v324 = vld [vmem:[#allocation3 + $0xd8] sm:$0xff]
    %v325 = vld [vmem:[#allocation3 + $0xe0] sm:$0xff]
    %v326 = vld [vmem:[#allocation3 + $0xe8] sm:$0xff]
    %v327 = vld [vmem:[#allocation3 + $0xf0] sm:$0xff]
    %v328 = vld [vmem:[#allocation3 + $0xf8] sm:$0xff]
    %v329 = vld [vmem:[#allocation3 + $0x100] sm:$0xff]
    %v330 = vld [vmem:[#allocation3 + $0x108] sm:$0xff]
    %v331 = vld [vmem:[#allocation3 + $0x110] sm:$0xff]
    %v332 = vld [vmem:[#allocation3 + $0x118] sm:$0xff]
    %v333 = vld [vmem:[#allocation3 + $0x120] sm:$0xff]
    %v334 = vld [vmem:[#allocation3 + $0x128] sm:$0xff]
    %v335 = vld [vmem:[#allocation3 + $0x130] sm:$0xff]
    %v336 = vld [vmem:[#allocation3 + $0x138] sm:$0xff]
    %v337 = vld [vmem:[#allocation3 + $0x140] sm:$0xff]
    %v338 = vld [vmem:[#allocation3 + $0x148] sm:$0xff]
    %v339 = vld [vmem:[#allocation3 + $0x150] sm:$0xff]
    %v340 = vld [vmem:[#allocation3 + $0x158] sm:$0xff]
    %v341 = vld [vmem:[#allocation3 + $0x160] sm:$0xff]
    %v342 = vld [vmem:[#allocation3 + $0x168] sm:$0xff]
    %v343 = vld [vmem:[#allocation3 + $0x170] sm:$0xff]
    %v344 = vld [vmem:[#allocation3 + $0x178] sm:$0xff]
    %v345 = vld [vmem:[#allocation3 + $0x180] sm:$0xff]
    %v346 = vld [vmem:[#allocation3 + $0x188] sm:$0xff]
    %v347 = vld [vmem:[#allocation3 + $0x190] sm:$0xff]
    %v348 = vld [vmem:[#allocation3 + $0x198] sm:$0xff]
    %v349 = vld [vmem:[#allocation3 + $0x1a0] sm:$0xff]
    %v350 = vld [vmem:[#allocation3 + $0x1a8] sm:$0xff]
    %v351 = vld [vmem:[#allocation3 + $0x1b0] sm:$0xff]
    %v352 = vld [vmem:[#allocation3 + $0x1b8] sm:$0xff]
    %v353 = vld [vmem:[#allocation3 + $0x1c0] sm:$0xff]
    %v354 = vld [vmem:[#allocation3 + $0x1c8] sm:$0xff]
    %v355 = vld [vmem:[#allocation3 + $0x1d0] sm:$0xff]
    %v356 = vld [vmem:[#allocation3 + $0x1d8] sm:$0xff]
    %v357 = vld [vmem:[#allocation3 + $0x1e0] sm:$0xff]
    %v358 = vld [vmem:[#allocation3 + $0x1e8] sm:$0xff]
    %v359 = vld [vmem:[#allocation3 + $0x1f0] sm:$0xff]
    %v360 = vld [vmem:[#allocation3 + $0x1f8] sm:$0xff]
    %v361 = vld [vmem:[#allocation3 + $0x200] sm:$0xff]
    %v362 = vld [vmem:[#allocation3 + $0x208] sm:$0xff]
    %v363 = vld [vmem:[#allocation3 + $0x210] sm:$0xff]
    %v364 = vld [vmem:[#allocation3 + $0x218] sm:$0xff]
    %v365 = vld [vmem:[#allocation3 + $0x220] sm:$0xff]
    %v366 = vld [vmem:[#allocation3 + $0x228] sm:$0xff]
    %v367 = vld [vmem:[#allocation3 + $0x230] sm:$0xff]
    %v368 = vld [vmem:[#allocation3 + $0x238] sm:$0xff]
    %v369 = vld [vmem:[#allocation3 + $0x240] sm:$0xff]
    %v370 = vld [vmem:[#allocation3 + $0x248] sm:$0xff]
    %v371 = vld [vmem:[#allocation3 + $0x250] sm:$0xff]
    %v372 = vld [vmem:[#allocation3 + $0x258] sm:$0xff]
    %v373 = vld [vmem:[#allocation3 + $0x260] sm:$0xff]
    %v374 = vld [vmem:[#allocation3 + $0x268] sm:$0xff]
    %v375 = vld [vmem:[#allocation3 + $0x270] sm:$0xff]
    %v376 = vld [vmem:[#allocation3 + $0x278] sm:$0xff]
    %v377 = vlaneseq
    %v378 = vshrl.u32 %v377, 7
    %v379 = vsub.s32 1, %v378
    %v380 = vrot.slane %v58, %v379
    %381 = vmatprep.subr.mxu0 0.0
    %382 = vmatpush1.msra.mxu0 %v297
    %383 = vmatprep.subr.mxu0 0.0
    %384 = vmatpush1.msra.mxu0 %v298
    %385 = vmatprep.subr.mxu0 0.0
    %386 = vmatpush1.msra.mxu0 %v299
    %387 = vmatprep.subr.mxu0 0.0
    %388 = vmatpush1.msra.mxu0 %v300
    %389 = vmatprep.subr.mxu0 0.0
    %390 = vmatpush1.msra.mxu0 %v301
    %391 = vmatprep.subr.mxu0 0.0
    %392 = vmatpush1.msra.mxu0 %v302
    %393 = vmatprep.subr.mxu0 0.0
    %394 = vmatpush1.msra.mxu0 %v303
    %395 = vmatprep.subr.mxu0 0.0
    %396 = vmatpush1.msra.mxu0 %v304
    %397 = vmatprep.subr.mxu0 0.0
    %398 = vmatpush1.msra.mxu0 %v305
    %399 = vmatprep.subr.mxu0 0.0
    %400 = vmatpush1.msra.mxu0 %v306
    %401 = vmatprep.subr.mxu0 0.0
    %402 = vmatpush1.msra.mxu0 %v307
    %403 = vmatprep.subr.mxu0 0.0
    %404 = vmatpush1.msra.mxu0 %v308
    %405 = vmatprep.subr.mxu0 0.0
    %406 = vmatpush1.msra.mxu0 %v309
    %407 = vmatprep.subr.mxu0 0.0
    %408 = vmatpush1.msra.mxu0 %v310
    %409 = vmatprep.subr.mxu0 0.0
    %410 = vmatpush1.msra.mxu0 %v311
    %411 = vmatprep.subr.mxu0 0.0
    %412 = vmatpush1.msra.mxu0 %v312
    %413 = vmatprep.subr.mxu0 0.0
    %414 = vmatpush1.msra.mxu0 %v313
    %415 = vmatprep.subr.mxu0 0.0
    %416 = vmatpush1.msra.mxu0 %v314
    %417 = vmatprep.subr.mxu0 0.0
    %418 = vmatpush1.msra.mxu0 %v315
    %419 = vmatprep.subr.mxu0 0.0
    %420 = vmatpush1.msra.mxu0 %v316
    %421 = vmatprep.subr.mxu0 0.0
    %422 = vmatpush1.msra.mxu0 %v317
    %423 = vmatprep.subr.mxu0 0.0
    %424 = vmatpush1.msra.mxu0 %v318
    %425 = vmatprep.subr.mxu0 0.0
    %426 = vmatpush1.msra.mxu0 %v319
    %427 = vmatprep.subr.mxu0 0.0
    %428 = vmatpush1.msra.mxu0 %v320
    %429 = vmatprep.subr.mxu0 0.0
    %430 = vmatpush1.msra.mxu0 %v321
    %431 = vmatprep.subr.mxu0 0.0
    %432 = vmatpush1.msra.mxu0 %v322
    %433 = vmatprep.subr.mxu0 0.0
    %434 = vmatpush1.msra.mxu0 %v323
    %435 = vmatprep.subr.mxu0 0.0
    %436 = vmatpush1.msra.mxu0 %v324
    %437 = vmatprep.subr.mxu0 0.0
    %438 = vmatpush1.msra.mxu0 %v325
    %439 = vmatprep.subr.mxu0 0.0
    %440 = vmatpush1.msra.mxu0 %v326
    %441 = vmatprep.subr.mxu0 0.0
    %442 = vmatpush1.msra.mxu0 %v327
    %443 = vmatprep.subr.mxu0 0.0
    %444 = vmatpush1.msra.mxu0 %v328
    %445 = vmatprep.mubr.f32.mxu0 %v268
    %446 = vmatmul.mubr.f32.gmra.mrb[0].mxu0 %v259
    %v447 = vpop.f32.mrb[0].mxu0
    %v448 = vadd.f32 %v380, %v447
    %v449 = vpop.f32.mrb[0].mxu0
    %450 = vmatprep.mubr.f32.mxu0 %v270
    %451 = vmatmul.mubr.f32.gmra.mrb[0].mxu0 %v260
    %v452 = vpop.f32.mrb[0].mxu0
    %v453 = vadd.f32 %v380, %v452
    %v454 = vpop.f32.mrb[0].mxu0
    %455 = vdwg.mxu0
    %456 = vmatprep.subr.mxu0 0.0
    %457 = vmatpush1.msra.mxu0 %v329
    %458 = vmatprep.subr.mxu0 0.0
    %459 = vmatpush1.msra.mxu0 %v330
    %460 = vmatprep.subr.mxu0 0.0
    %461 = vmatpush1.msra.mxu0 %v331
    %462 = vmatprep.subr.mxu0 0.0
    %463 = vmatpush1.msra.mxu0 %v332
    %464 = vmatprep.subr.mxu0 0.0
    %465 = vmatpush1.msra.mxu0 %v333
    %466 = vmatprep.subr.mxu0 0.0
    %467 = vmatpush1.msra.mxu0 %v334
    %468 = vmatprep.subr.mxu0 0.0
    %469 = vmatpush1.msra.mxu0 %v335
    %470 = vmatprep.subr.mxu0 0.0
    %471 = vmatpush1.msra.mxu0 %v336
    %472 = vmatprep.subr.mxu0 0.0
    %473 = vmatpush1.msra.mxu0 %v337
    %474 = vmatprep.subr.mxu0 0.0
    %475 = vmatpush1.msra.mxu0 %v338
    %476 = vmatprep.subr.mxu0 0.0
    %477 = vmatpush1.msra.mxu0 %v339
    %478 = vmatprep.subr.mxu0 0.0
    %479 = vmatpush1.msra.mxu0 %v340
    %480 = vmatprep.subr.mxu0 0.0
    %481 = vmatpush1.msra.mxu0 %v341
    %482 = vmatprep.subr.mxu0 0.0
    %483 = vmatpush1.msra.mxu0 %v342
    %484 = vmatprep.subr.mxu0 0.0
    %485 = vmatpush1.msra.mxu0 %v343
    %486 = vmatprep.subr.mxu0 0.0
    %487 = vmatpush1.msra.mxu0 %v344
    %488 = vmatprep.subr.mxu0 0.0
    %489 = vmatpush1.msra.mxu0 %v345
    %490 = vmatprep.subr.mxu0 0.0
    %491 = vmatpush1.msra.mxu0 %v346
    %492 = vmatprep.subr.mxu0 0.0
    %493 = vmatpush1.msra.mxu0 %v347
    %494 = vmatprep.subr.mxu0 0.0
    %495 = vmatpush1.msra.mxu0 %v348
    %496 = vmatprep.subr.mxu0 0.0
    %497 = vmatpush1.msra.mxu0 %v349
    %498 = vmatprep.subr.mxu0 0.0
    %499 = vmatpush1.msra.mxu0 %v350
    %500 = vmatprep.subr.mxu0 0.0
    %501 = vmatpush1.msra.mxu0 %v351
    %502 = vmatprep.subr.mxu0 0.0
    %503 = vmatpush1.msra.mxu0 %v352
    %504 = vmatprep.subr.mxu0 0.0
    %505 = vmatpush1.msra.mxu0 %v353
    %506 = vmatprep.subr.mxu0 0.0
    %507 = vmatpush1.msra.mxu0 %v354
    %508 = vmatprep.subr.mxu0 0.0
    %509 = vmatpush1.msra.mxu0 %v355
    %510 = vmatprep.subr.mxu0 0.0
    %511 = vmatpush1.msra.mxu0 %v356
    %512 = vmatprep.subr.mxu0 0.0
    %513 = vmatpush1.msra.mxu0 %v357
    %514 = vmatprep.subr.mxu0 0.0
    %515 = vmatpush1.msra.mxu0 %v358
    %516 = vmatprep.subr.mxu0 0.0
    %517 = vmatpush1.msra.mxu0 %v359
    %518 = vmatprep.subr.mxu0 0.0
    %519 = vmatpush1.msra.mxu0 %v360
    %520 = vmatprep.mubr.f32.mxu0 %v284
    %521 = vmatmul.mubr.f32.gmra.mrb[0].mxu0 %v276
    %v522 = vpop.f32.mrb[0].mxu0
    %v523 = vadd.f32 %v448, %v522
    %v524 = vpop.f32.mrb[0].mxu0
    %525 = vmatprep.mubr.f32.mxu0 %v286
    %526 = vmatmul.mubr.f32.gmra.mrb[0].mxu0 %v278
    %v527 = vpop.f32.mrb[0].mxu0
    %v528 = vadd.f32 %v453, %v527
    %v529 = vpop.f32.mrb[0].mxu0
    %530 = vdwg.mxu0
    %531 = vmatprep.subr.mxu0 0.0
    %532 = vmatpush1.msra.mxu0 %v361
    %533 = vmatprep.subr.mxu0 0.0
    %534 = vmatpush1.msra.mxu0 %v362
    %535 = vmatprep.subr.mxu0 0.0
    %536 = vmatpush1.msra.mxu0 %v363
    %537 = vmatprep.subr.mxu0 0.0
    %538 = vmatpush1.msra.mxu0 %v364
    %539 = vmatprep.subr.mxu0 0.0
    %540 = vmatpush1.msra.mxu0 %v365
    %541 = vmatprep.subr.mxu0 0.0
    %542 = vmatpush1.msra.mxu0 %v366
    %543 = vmatprep.subr.mxu0 0.0
    %544 = vmatpush1.msra.mxu0 %v367
    %545 = vmatprep.subr.mxu0 0.0
    %546 = vmatpush1.msra.mxu0 %v368
    %547 = vmatprep.subr.mxu0 0.0
    %548 = vmatpush1.msra.mxu0 %v369
    %549 = vmatprep.subr.mxu0 0.0
    %550 = vmatpush1.msra.mxu0 %v370
    %551 = vmatprep.subr.mxu0 0.0
    %552 = vmatpush1.msra.mxu0 %v371
    %553 = vmatprep.subr.mxu0 0.0
    %554 = vmatpush1.msra.mxu0 %v372
    %555 = vmatprep.subr.mxu0 0.0
    %556 = vmatpush1.msra.mxu0 %v373
    %557 = vmatprep.subr.mxu0 0.0
    %558 = vmatpush1.msra.mxu0 %v374
    %559 = vmatprep.subr.mxu0 0.0
    %560 = vmatpush1.msra.mxu0 %v375
    %561 = vmatprep.subr.mxu0 0.0
    %562 = vmatpush1.msra.mxu0 %v376
    %563 = vmatprep.subr.mxu0 0.0
    %564 = vmatpush1.msra.mxu0 0.0
    %565 = vmatprep.subr.mxu0 0.0
    %566 = vmatpush1.msra.mxu0 0.0
    %567 = vmatprep.subr.mxu0 0.0
    %568 = vmatpush1.msra.mxu0 0.0
    %569 = vmatprep.subr.mxu0 0.0
    %570 = vmatpush1.msra.mxu0 0.0
    %571 = vmatprep.subr.mxu0 0.0
    %572 = vmatpush1.msra.mxu0 0.0
    %573 = vmatprep.subr.mxu0 0.0
    %574 = vmatpush1.msra.mxu0 0.0
    %575 = vmatprep.subr.mxu0 0.0
    %576 = vmatpush1.msra.mxu0 0.0
    %577 = vmatprep.subr.mxu0 0.0
    %578 = vmatpush1.msra.mxu0 0.0
    %579 = vmatprep.subr.mxu0 0.0
    %580 = vmatpush1.msra.mxu0 0.0
    %581 = vmatprep.subr.mxu0 0.0
    %582 = vmatpush1.msra.mxu0 0.0
    %583 = vmatprep.subr.mxu0 0.0
    %584 = vmatpush1.msra.mxu0 0.0
    %585 = vmatprep.subr.mxu0 0.0
    %586 = vmatpush1.msra.mxu0 0.0
    %587 = vmatprep.subr.mxu0 0.0
    %588 = vmatpush1.msra.mxu0 0.0
    %589 = vmatprep.subr.mxu0 0.0
    %590 = vmatpush1.msra.mxu0 0.0
    %591 = vmatprep.subr.mxu0 0.0
    %592 = vmatpush1.msra.mxu0 0.0
    %593 = vmatprep.subr.mxu0 0.0
    %594 = vmatpush1.msra.mxu0 0.0
    %595 = vmatprep.mubr.f32.mxu0 0.0
    %596 = vmatmul.mubr.f32.gmra.mrb[0].mxu0 %v292
    %v597 = vpop.f32.mrb[0].mxu0
    %v598 = vadd.f32 %v523, %v597
    %v599 = vpop.f32.mrb[0].mxu0
    %600 = vmatprep.mubr.f32.mxu0 0.0
    %601 = vmatmul.mubr.f32.gmra.mrb[0].mxu0 %v294
    %v602 = vpop.f32.mrb[0].mxu0
    %v603 = vadd.f32 %v528, %v602
    %v604 = vpop.f32.mrb[0].mxu0
    %605 = vdwg.mxu0
    %v606 = vmax.f32 %v598, 0.0
    %v607 = vmax.f32 %v603, 0.0
    %608 = vst [vmem:[#allocation2] sm:$0xff] %v606
    %609 = vst [vmem:[#allocation2 + $0x8] sm:$0xff] %v607
    %v610 = vld [vmem:[#allocation2] ss:$10 sm:$0x3]
    %s611 = scalar_lea.vmem [#allocation2], 1
    %v612 = vld [vmem:[%s611] ss:$10 sm:$0x3]
    %v613 = vmax.f32 %v610, %v612
    %s614 = scalar_lea.vmem [#allocation2], 2
    %v615 = vld [vmem:[%s614] ss:$10 sm:$0x3]
    %s616 = scalar_lea.vmem [#allocation2], 3
    %v617 = vld [vmem:[%s616] ss:$10 sm:$0x3]
    %v618 = vmax.f32 %v615, %v617
    %s619 = scalar_lea.vmem [#allocation2], 4
    %v620 = vld [vmem:[%s619] ss:$10 sm:$0x3]
    %s621 = scalar_lea.vmem [#allocation2], 5
    %v622 = vld [vmem:[%s621] ss:$10 sm:$0x3]
    %v623 = vmax.f32 %v620, %v622
    %v624 = vld [vmem:[#allocation6] sm:$0xff]
    %v625 = vld [vmem:[#allocation6 + $0x8] sm:$0xff]
    %v626 = vld [vmem:[#allocation6 + $0x10] sm:$0xff]
    %v627 = vld [vmem:[#allocation6 + $0x18] sm:$0xff]
    %v628 = vld [vmem:[#allocation6 + $0x20] sm:$0xff]
    %v629 = vld [vmem:[#allocation6 + $0x28] sm:$0xff]
    %v630 = vld [vmem:[#allocation6 + $0x30] sm:$0xff]
    %v631 = vld [vmem:[#allocation6 + $0x38] sm:$0xff]
    %v632 = vld [vmem:[#allocation6 + $0x40] sm:$0xff]
    %v633 = vld [vmem:[#allocation6 + $0x48] sm:$0xff]
    %v634 = vld [vmem:[#allocation6 + $0x50] sm:$0xff]
    %v635 = vld [vmem:[#allocation6 + $0x58] sm:$0xff]
    %v636 = vld [vmem:[#allocation6 + $0x60] sm:$0xff]
    %v637 = vld [vmem:[#allocation6 + $0x68] sm:$0xff]
    %v638 = vld [vmem:[#allocation6 + $0x70] sm:$0xff]
    %v639 = vld [vmem:[#allocation6 + $0x78] sm:$0xff]
    %v640 = vld [vmem:[#allocation6 + $0x80] sm:$0xff]
    %v641 = vld [vmem:[#allocation6 + $0x88] sm:$0xff]
    %v642 = vld [vmem:[#allocation6 + $0x90] sm:$0xff]
    %v643 = vld [vmem:[#allocation6 + $0x98] sm:$0xff]
    %v644 = vld [vmem:[#allocation6 + $0xa0] sm:$0xff]
    %v645 = vld [vmem:[#allocation6 + $0xa8] sm:$0xff]
    %v646 = vld [vmem:[#allocation6 + $0xb0] sm:$0xff]
    %v647 = vld [vmem:[#allocation6 + $0xb8] sm:$0xff]
    %v648 = vld [vmem:[#allocation6 + $0xc0] sm:$0xff]
    %v649 = vld [vmem:[#allocation6 + $0xc8] sm:$0xff]
    %v650 = vld [vmem:[#allocation6 + $0xd0] sm:$0xff]
    %v651 = vld [vmem:[#allocation6 + $0xd8] sm:$0xff]
    %v652 = vld [vmem:[#allocation6 + $0xe0] sm:$0xff]
    %v653 = vld [vmem:[#allocation6 + $0xe8] sm:$0xff]
    %v654 = vld [vmem:[#allocation6 + $0xf0] sm:$0xff]
    %v655 = vld [vmem:[#allocation6 + $0xf8] sm:$0xff]
    %v656 = vld [vmem:[#allocation6 + $0x100] sm:$0xff]
    %v657 = vld [vmem:[#allocation6 + $0x108] sm:$0xff]
    %v658 = vld [vmem:[#allocation6 + $0x110] sm:$0xff]
    %v659 = vld [vmem:[#allocation6 + $0x118] sm:$0xff]
    %v660 = vld [vmem:[#allocation6 + $0x120] sm:$0xff]
    %v661 = vld [vmem:[#allocation6 + $0x128] sm:$0xff]
    %v662 = vld [vmem:[#allocation6 + $0x130] sm:$0xff]
    %v663 = vld [vmem:[#allocation6 + $0x138] sm:$0xff]
    %v664 = vld [vmem:[#allocation6 + $0x140] sm:$0xff]
    %v665 = vld [vmem:[#allocation6 + $0x148] sm:$0xff]
    %v666 = vld [vmem:[#allocation6 + $0x150] sm:$0xff]
    %v667 = vld [vmem:[#allocation6 + $0x158] sm:$0xff]
    %v668 = vld [vmem:[#allocation6 + $0x160] sm:$0xff]
    %v669 = vld [vmem:[#allocation6 + $0x168] sm:$0xff]
    %v670 = vld [vmem:[#allocation6 + $0x170] sm:$0xff]
    %v671 = vld [vmem:[#allocation6 + $0x178] sm:$0xff]
    %v672 = vlaneseq
    %v673 = vshrl.u32 %v672, 7
    %v674 = vsub.s32 2, %v673
    %v675 = vrot.slane %v58, %v674
    %676 = vmatprep.subr.mxu0 0.0
    %677 = vmatpush1.msra.mxu0 %v624
    %678 = vmatprep.subr.mxu0 0.0
    %679 = vmatpush1.msra.mxu0 %v625
    %680 = vmatprep.subr.mxu0 0.0
    %681 = vmatpush1.msra.mxu0 %v626
    %682 = vmatprep.subr.mxu0 0.0
    %683 = vmatpush1.msra.mxu0 %v627
    %684 = vmatprep.subr.mxu0 0.0
    %685 = vmatpush1.msra.mxu0 %v628
    %686 = vmatprep.subr.mxu0 0.0
    %687 = vmatpush1.msra.mxu0 %v629
    %688 = vmatprep.subr.mxu0 0.0
    %689 = vmatpush1.msra.mxu0 %v630
    %690 = vmatprep.subr.mxu0 0.0
    %691 = vmatpush1.msra.mxu0 %v631
    %692 = vmatprep.subr.mxu0 0.0
    %693 = vmatpush1.msra.mxu0 %v632
    %694 = vmatprep.subr.mxu0 0.0
    %695 = vmatpush1.msra.mxu0 %v633
    %696 = vmatprep.subr.mxu0 0.0
    %697 = vmatpush1.msra.mxu0 %v634
    %698 = vmatprep.subr.mxu0 0.0
    %699 = vmatpush1.msra.mxu0 %v635
    %700 = vmatprep.subr.mxu0 0.0
    %701 = vmatpush1.msra.mxu0 %v636
    %702 = vmatprep.subr.mxu0 0.0
    %703 = vmatpush1.msra.mxu0 %v637
    %704 = vmatprep.subr.mxu0 0.0
    %705 = vmatpush1.msra.mxu0 %v638
    %706 = vmatprep.subr.mxu0 0.0
    %707 = vmatpush1.msra.mxu0 %v639
    %708 = vmatprep.subr.mxu0 0.0
    %709 = vmatpush1.msra.mxu0 %v640
    %710 = vmatprep.subr.mxu0 0.0
    %711 = vmatpush1.msra.mxu0 %v641
    %712 = vmatprep.subr.mxu0 0.0
    %713 = vmatpush1.msra.mxu0 %v642
    %714 = vmatprep.subr.mxu0 0.0
    %715 = vmatpush1.msra.mxu0 %v643
    %716 = vmatprep.subr.mxu0 0.0
    %717 = vmatpush1.msra.mxu0 %v644
    %718 = vmatprep.subr.mxu0 0.0
    %719 = vmatpush1.msra.mxu0 %v645
    %720 = vmatprep.subr.mxu0 0.0
    %721 = vmatpush1.msra.mxu0 %v646
    %722 = vmatprep.subr.mxu0 0.0
    %723 = vmatpush1.msra.mxu0 %v647
    %724 = vmatprep.subr.mxu0 0.0
    %725 = vmatpush1.msra.mxu0 %v648
    %726 = vmatprep.subr.mxu0 0.0
    %727 = vmatpush1.msra.mxu0 %v649
    %728 = vmatprep.subr.mxu0 0.0
    %729 = vmatpush1.msra.mxu0 %v650
    %730 = vmatprep.subr.mxu0 0.0
    %731 = vmatpush1.msra.mxu0 %v651
    %732 = vmatprep.subr.mxu0 0.0
    %733 = vmatpush1.msra.mxu0 %v652
    %734 = vmatprep.subr.mxu0 0.0
    %735 = vmatpush1.msra.mxu0 %v653
    %736 = vmatprep.subr.mxu0 0.0
    %737 = vmatpush1.msra.mxu0 %v654
    %738 = vmatprep.subr.mxu0 0.0
    %739 = vmatpush1.msra.mxu0 %v655
    %740 = vmatprep.mubr.f32.mxu0 %v618
    %741 = vmatmul.mubr.f32.gmra.mrb[0].mxu0 %v613
    %v742 = vpop.f32.mrb[0].mxu0
    %v743 = vadd.f32 %v675, %v742
    %v744 = vpop.f32.mrb[0].mxu0
    %745 = vdwg.mxu0
    %746 = vmatprep.subr.mxu0 0.0
    %747 = vmatpush1.msra.mxu0 %v656
    %748 = vmatprep.subr.mxu0 0.0
    %749 = vmatpush1.msra.mxu0 %v657
    %750 = vmatprep.subr.mxu0 0.0
    %751 = vmatpush1.msra.mxu0 %v658
    %752 = vmatprep.subr.mxu0 0.0
    %753 = vmatpush1.msra.mxu0 %v659
    %754 = vmatprep.subr.mxu0 0.0
    %755 = vmatpush1.msra.mxu0 %v660
    %756 = vmatprep.subr.mxu0 0.0
    %757 = vmatpush1.msra.mxu0 %v661
    %758 = vmatprep.subr.mxu0 0.0
    %759 = vmatpush1.msra.mxu0 %v662
    %760 = vmatprep.subr.mxu0 0.0
    %761 = vmatpush1.msra.mxu0 %v663
    %762 = vmatprep.subr.mxu0 0.0
    %763 = vmatpush1.msra.mxu0 %v664
    %764 = vmatprep.subr.mxu0 0.0
    %765 = vmatpush1.msra.mxu0 %v665
    %766 = vmatprep.subr.mxu0 0.0
    %767 = vmatpush1.msra.mxu0 %v666
    %768 = vmatprep.subr.mxu0 0.0
    %769 = vmatpush1.msra.mxu0 %v667
    %770 = vmatprep.subr.mxu0 0.0
    %771 = vmatpush1.msra.mxu0 %v668
    %772 = vmatprep.subr.mxu0 0.0
    %773 = vmatpush1.msra.mxu0 %v669
    %774 = vmatprep.subr.mxu0 0.0
    %775 = vmatpush1.msra.mxu0 %v670
    %776 = vmatprep.subr.mxu0 0.0
    %777 = vmatpush1.msra.mxu0 %v671
    %778 = vmatprep.subr.mxu0 0.0
    %779 = vmatpush1.msra.mxu0 0.0
    %780 = vmatprep.subr.mxu0 0.0
    %781 = vmatpush1.msra.mxu0 0.0
    %782 = vmatprep.subr.mxu0 0.0
    %783 = vmatpush1.msra.mxu0 0.0
    %784 = vmatprep.subr.mxu0 0.0
    %785 = vmatpush1.msra.mxu0 0.0
    %786 = vmatprep.subr.mxu0 0.0
    %787 = vmatpush1.msra.mxu0 0.0
    %788 = vmatprep.subr.mxu0 0.0
    %789 = vmatpush1.msra.mxu0 0.0
    %790 = vmatprep.subr.mxu0 0.0
    %791 = vmatpush1.msra.mxu0 0.0
    %792 = vmatprep.subr.mxu0 0.0
    %793 = vmatpush1.msra.mxu0 0.0
    %794 = vmatprep.subr.mxu0 0.0
    %795 = vmatpush1.msra.mxu0 0.0
    %796 = vmatprep.subr.mxu0 0.0
    %797 = vmatpush1.msra.mxu0 0.0
    %798 = vmatprep.subr.mxu0 0.0
    %799 = vmatpush1.msra.mxu0 0.0
    %800 = vmatprep.subr.mxu0 0.0
    %801 = vmatpush1.msra.mxu0 0.0
    %802 = vmatprep.subr.mxu0 0.0
    %803 = vmatpush1.msra.mxu0 0.0
    %804 = vmatprep.subr.mxu0 0.0
    %805 = vmatpush1.msra.mxu0 0.0
    %806 = vmatprep.subr.mxu0 0.0
    %807 = vmatpush1.msra.mxu0 0.0
    %808 = vmatprep.subr.mxu0 0.0
    %809 = vmatpush1.msra.mxu0 0.0
    %810 = vmatprep.mubr.f32.mxu0 0.0
    %811 = vmatmul.mubr.f32.gmra.mrb[0].mxu0 %v623
    %v812 = vpop.f32.mrb[0].mxu0
    %v813 = vadd.f32 %v743, %v812
    %v814 = vpop.f32.mrb[0].mxu0
    %815 = vdwg.mxu0
    %v816 = vmax.f32 %v813, 0.0
    %v817 = vld [vmem:[%s5] sm:$0xff]
    %v818 = vld [vmem:[%s5 + $0x8] sm:$0xff]
    %v819 = vld [vmem:[%s5 + $0x10] sm:$0xff]
    %v820 = vld [vmem:[%s5 + $0x18] sm:$0xff]
    %v821 = vld [vmem:[%s5 + $0x20] sm:$0xff]
    %v822 = vld [vmem:[%s5 + $0x28] sm:$0xff]
    %v823 = vld [vmem:[%s5 + $0x30] sm:$0xff]
    %v824 = vld [vmem:[%s5 + $0x38] sm:$0xff]
    %v825 = vld [vmem:[%s5 + $0x40] sm:$0xff]
    %v826 = vld [vmem:[%s5 + $0x48] sm:$0xff]
    %v827 = vld [vmem:[%s5 + $0x50] sm:$0xff]
    %v828 = vld [vmem:[%s5 + $0x58] sm:$0xff]
    %v829 = vld [vmem:[%s5 + $0x60] sm:$0xff]
    %v830 = vld [vmem:[%s5 + $0x68] sm:$0xff]
    %v831 = vld [vmem:[%s5 + $0x70] sm:$0xff]
    %v832 = vld [vmem:[%s5 + $0x78] sm:$0xff]
    %v833 = vlaneseq
    %v834 = vshrl.u32 %v833, 7
    %v835 = vsub.s32 3, %v834
    %v836 = vrot.slane %v58, %v835
    %837 = vmatprep.subr.mxu0 0.0
    %838 = vmatpush1.msra.mxu0 %v817
    %839 = vmatprep.subr.mxu0 0.0
    %840 = vmatpush1.msra.mxu0 %v818
    %841 = vmatprep.subr.mxu0 0.0
    %842 = vmatpush1.msra.mxu0 %v819
    %843 = vmatprep.subr.mxu0 0.0
    %844 = vmatpush1.msra.mxu0 %v820
    %845 = vmatprep.subr.mxu0 0.0
    %846 = vmatpush1.msra.mxu0 %v821
    %847 = vmatprep.subr.mxu0 0.0
    %848 = vmatpush1.msra.mxu0 %v822
    %849 = vmatprep.subr.mxu0 0.0
    %850 = vmatpush1.msra.mxu0 %v823
    %851 = vmatprep.subr.mxu0 0.0
    %852 = vmatpush1.msra.mxu0 %v824
    %853 = vmatprep.subr.mxu0 0.0
    %854 = vmatpush1.msra.mxu0 %v825
    %855 = vmatprep.subr.mxu0 0.0
    %856 = vmatpush1.msra.mxu0 %v826
    %857 = vmatprep.subr.mxu0 0.0
    %858 = vmatpush1.msra.mxu0 %v827
    %859 = vmatprep.subr.mxu0 0.0
    %860 = vmatpush1.msra.mxu0 %v828
    %861 = vmatprep.subr.mxu0 0.0
    %862 = vmatpush1.msra.mxu0 %v829
    %863 = vmatprep.subr.mxu0 0.0
    %864 = vmatpush1.msra.mxu0 %v830
    %865 = vmatprep.subr.mxu0 0.0
    %866 = vmatpush1.msra.mxu0 %v831
    %867 = vmatprep.subr.mxu0 0.0
    %868 = vmatpush1.msra.mxu0 %v832
    %869 = vmatprep.subr.mxu0 0.0
    %870 = vmatpush1.msra.mxu0 0.0
    %871 = vmatprep.subr.mxu0 0.0
    %872 = vmatpush1.msra.mxu0 0.0
    %873 = vmatprep.subr.mxu0 0.0
    %874 = vmatpush1.msra.mxu0 0.0
    %875 = vmatprep.subr.mxu0 0.0
    %876 = vmatpush1.msra.mxu0 0.0
    %877 = vmatprep.subr.mxu0 0.0
    %878 = vmatpush1.msra.mxu0 0.0
    %879 = vmatprep.subr.mxu0 0.0
    %880 = vmatpush1.msra.mxu0 0.0
    %881 = vmatprep.subr.mxu0 0.0
    %882 = vmatpush1.msra.mxu0 0.0
    %883 = vmatprep.subr.mxu0 0.0
    %884 = vmatpush1.msra.mxu0 0.0
    %885 = vmatprep.subr.mxu0 0.0
    %886 = vmatpush1.msra.mxu0 0.0
    %887 = vmatprep.subr.mxu0 0.0
    %888 = vmatpush1.msra.mxu0 0.0
    %889 = vmatprep.subr.mxu0 0.0
    %890 = vmatpush1.msra.mxu0 0.0
    %891 = vmatprep.subr.mxu0 0.0
    %892 = vmatpush1.msra.mxu0 0.0
    %893 = vmatprep.subr.mxu0 0.0
    %894 = vmatpush1.msra.mxu0 0.0
    %895 = vmatprep.subr.mxu0 0.0
    %896 = vmatpush1.msra.mxu0 0.0
    %897 = vmatprep.subr.mxu0 0.0
    %898 = vmatpush1.msra.mxu0 0.0
    %899 = vmatprep.subr.mxu0 0.0
    %900 = vmatpush1.msra.mxu0 0.0
    %901 = vmatprep.mubr.f32.mxu0 0.0
    %902 = vmatmul.mubr.f32.gmra.mrb[0].mxu0 %v816
    %v903 = vpop.f32.mrb[0].mxu0
    %v904 = vadd.f32 %v836, %v903
    %v905 = vpop.f32.mrb[0].mxu0
    %906 = vdwg.mxu0
    %v907 = vmax.f32 %v904, 0.0
    %v908 = vld [vmem:[%s6] sm:$0xff]
    %v909 = vld [vmem:[%s6 + $0x8] sm:$0xff]
    %v910 = vld [vmem:[%s6 + $0x10] sm:$0xff]
    %v911 = vld [vmem:[%s6 + $0x18] sm:$0xff]
    %v912 = vld [vmem:[%s6 + $0x20] sm:$0xff]
    %v913 = vld [vmem:[%s6 + $0x28] sm:$0xff]
    %v914 = vld [vmem:[%s6 + $0x30] sm:$0xff]
    %v915 = vld [vmem:[%s6 + $0x38] sm:$0xff]
    %v916 = vlaneseq
    %v917 = vshrl.u32 %v916, 7
    %v918 = vsub.s32 4, %v917
    %v919 = vrot.slane %v58, %v918
    %vm920 = vcmask 523264
    %v922 = vsel %vm920, %v907, 0
    %924 = vmatprep.subr.mxu0 0.0
    %925 = vmatpush1.msra.mxu0 %v908
    %926 = vmatprep.subr.mxu0 0.0
    %927 = vmatpush1.msra.mxu0 %v909
    %928 = vmatprep.subr.mxu0 0.0
    %929 = vmatpush1.msra.mxu0 %v910
    %930 = vmatprep.subr.mxu0 0.0
    %931 = vmatpush1.msra.mxu0 %v911
    %932 = vmatprep.subr.mxu0 0.0
    %933 = vmatpush1.msra.mxu0 %v912
    %934 = vmatprep.subr.mxu0 0.0
    %935 = vmatpush1.msra.mxu0 %v913
    %936 = vmatprep.subr.mxu0 0.0
    %937 = vmatpush1.msra.mxu0 %v914
    %938 = vmatprep.subr.mxu0 0.0
    %939 = vmatpush1.msra.mxu0 %v915
    %940 = vmatprep.subr.mxu0 0.0
    %941 = vmatpush1.msra.mxu0 0.0
    %942 = vmatprep.subr.mxu0 0.0
    %943 = vmatpush1.msra.mxu0 0.0
    %944 = vmatprep.subr.mxu0 0.0
    %945 = vmatpush1.msra.mxu0 0.0
    %946 = vmatprep.subr.mxu0 0.0
    %947 = vmatpush1.msra.mxu0 0.0
    %948 = vmatprep.subr.mxu0 0.0
    %949 = vmatpush1.msra.mxu0 0.0
    %950 = vmatprep.subr.mxu0 0.0
    %951 = vmatpush1.msra.mxu0 0.0
    %952 = vmatprep.subr.mxu0 0.0
    %953 = vmatpush1.msra.mxu0 0.0
    %954 = vmatprep.subr.mxu0 0.0
    %955 = vmatpush1.msra.mxu0 0.0
    %956 = vmatprep.subr.mxu0 0.0
    %957 = vmatpush1.msra.mxu0 0.0
    %958 = vmatprep.subr.mxu0 0.0
    %959 = vmatpush1.msra.mxu0 0.0
    %960 = vmatprep.subr.mxu0 0.0
    %961 = vmatpush1.msra.mxu0 0.0
    %962 = vmatprep.subr.mxu0 0.0
    %963 = vmatpush1.msra.mxu0 0.0
    %964 = vmatprep.subr.mxu0 0.0
    %965 = vmatpush1.msra.mxu0 0.0
    %966 = vmatprep.subr.mxu0 0.0
    %967 = vmatpush1.msra.mxu0 0.0
    %968 = vmatprep.subr.mxu0 0.0
    %969 = vmatpush1.msra.mxu0 0.0
    %970 = vmatprep.subr.mxu0 0.0
    %971 = vmatpush1.msra.mxu0 0.0
    %972 = vmatprep.subr.mxu0 0.0
    %973 = vmatpush1.msra.mxu0 0.0
    %974 = vmatprep.subr.mxu0 0.0
    %975 = vmatpush1.msra.mxu0 0.0
    %976 = vmatprep.subr.mxu0 0.0
    %977 = vmatpush1.msra.mxu0 0.0
    %978 = vmatprep.subr.mxu0 0.0
    %979 = vmatpush1.msra.mxu0 0.0
    %980 = vmatprep.subr.mxu0 0.0
    %981 = vmatpush1.msra.mxu0 0.0
    %982 = vmatprep.subr.mxu0 0.0
    %983 = vmatpush1.msra.mxu0 0.0
    %984 = vmatprep.subr.mxu0 0.0
    %985 = vmatpush1.msra.mxu0 0.0
    %986 = vmatprep.subr.mxu0 0.0
    %987 = vmatpush1.msra.mxu0 0.0
    %988 = vmatprep.mubr.f32.mxu0 0.0
    %989 = vmatmul.mubr.f32.gmra.mrb[0].mxu0 %v922
    %v990 = vpop.f32.mrb[0].mxu0
    %v991 = vadd.f32 %v919, %v990
    %v992 = vpop.f32.mrb[0].mxu0
    %993 = vdwg.mxu0
    %994 = vst [vmem:[#allocation8] sm:$0x3] %v991
    // Predicated region
    $region42: #{tpu_custom_call.1} parent=1 // pred_check
      _
    $region43: #{tpu_custom_call.1} parent=1 // pred_check_branch
      %996 = sbr.rel (0) target = $region45
    $region44: #{tpu_custom_call.1} parent=1 // pred_region
      %s998 = ssub.s32 32, 32
      %999 = vsyncadd [#allocation5], %s998
      %s1001 = sshll.u32 [#allocation8], 4
      %s1002 = int_to_ptr.vmem [resolvable:$true] %s1001
      %1004 = dma.vmem_to_hbm [thread:$0]  %s1002, 32, %s8, [#allocation5]
    $region45: #{tpu_custom_call.1} parent=1 // pred_fallthru
      _
    // Predicated region
    $region46: #{tpu_custom_call.1} parent=1 // pred_check
      _
    $region47: #{tpu_custom_call.1} parent=1 // pred_check_branch
      %1006 = sbr.rel (0) target = $region49
    $region48: #{tpu_custom_call.1} parent=1 // pred_region
      %1007 = dma.done [#allocation5], 32
    $region49: #{tpu_custom_call.1} parent=1 // pred_fallthru
      _
    %1008 = vsyncpa [#allocation4], 1
    %1009 = vsyncpa [#allocation7], 1
    %1010 = vsyncpa [#allocation5], 1

</llo_original>
